<compile_context>
chip_gen: v5e
topology: v5e:2x2
jax: 0.10.0
libtpu: 0.0.40
codegen_flags: <defaults>
</compile_context>

<pallas_src>
import jax
import jax.numpy as jnp
from jax import lax
from jax.experimental import pallas as pl
from jax.experimental.pallas import tpu as pltpu


def _round_up(n, m):
    return ((n + m - 1) // m) * m


def rnn_kernel(x_ref, wih_ref, whh_ref, b_ref, wout_ref, bout_ref,
               out_ref, pre_ref):
    """Full RNN forward in one kernel invocation.

    x_ref   : (S, B, I)  whole input sequence (f32 or bf16), VMEM-resident
    wih_ref : (I, H)     input->hidden weight  (transposed vs. PyTorch)
    whh_ref : (H, H)     hidden->hidden weight (transposed vs. PyTorch)
    b_ref   : (1, H)     b_ih + b_hh (f32)
    wout_ref: (H, O)     output Linear weight  (transposed vs. PyTorch)
    bout_ref: (1, O)     output Linear bias (f32)
    out_ref : (1, B, O)  output (f32)
    pre_ref : (S, B, H)  f32 VMEM scratch: x_t @ W_ih + b for every step
    """
    S, B, I = x_ref.shape
    H = whh_ref.shape[0]

    # ---- Phase 0 (parallel, off the serial chain): input projection -------
    # One (S*B, I) @ (I, H) matmul for all time steps; bias folded in once.
    x_all = x_ref[...].reshape(S * B, I)
    pre_all = (jnp.dot(x_all, wih_ref[...], preferred_element_type=jnp.float32)
               + b_ref[...])                       # f32 accumulate + f32 bias
    pre_ref[...] = pre_all.reshape(S, B, H)

    # ---- Phase 1 (serial recurrence): only h @ W_hh + tanh per step -------
    w_dtype = whh_ref.dtype

    def step(t, h):                                # h: (B, H) f32, lives in vregs
        z = pre_ref[t] + jnp.dot(h.astype(w_dtype), whh_ref[...],
                                 preferred_element_type=jnp.float32)
        return jnp.tanh(z)                         # f32 VPU/EUP math (v5e-safe)

    h_last = lax.fori_loop(0, S, step, jnp.zeros((B, H), jnp.float32),
                           unroll=True)

    # ---- Output head: lane-dense store (O padded to 128 in the wrapper) ---
    out = (jnp.dot(h_last.astype(wout_ref.dtype), wout_ref[...],
                   preferred_element_type=jnp.float32)
           + bout_ref[...])
    out_ref[0] = out.astype(out_ref.dtype)


def rnn_model_forward(x, w_ih, w_hh, b, w_out, b_out, *,
                      param_dtype=jnp.float32):
    """x: [S, B, I] float32.  Returns [1, B, O] float32 (same as the torch module).

    Weight layout: (in_features, out_features), i.e. transposed vs. PyTorch.
    `b` is b_ih + b_hh.  `param_dtype` controls the MXU input dtype
    (f32 or bf16); accumulation and elementwise math are always f32.
    """
    S, B, I = x.shape
    H = w_ih.shape[1]
    O = w_out.shape[1]

    # Hardware-friendly padded sizes: sublanes (8) for batch, lanes (128) for
    # hidden/output so matmuls and the output store are unmasked.
    B_pad = _round_up(B, 8)
    H_pad = _round_up(H, 128)
    O_pad = _round_up(O, 128)

    # Zero padding preserves semantics: padded hidden columns stay exactly 0
    # through tanh(0), padded output columns/batch rows are sliced off below.
    x_p = jnp.pad(x, ((0, 0), (0, B_pad - B), (0, 0))).astype(param_dtype)
    w_ih_p = jnp.pad(w_ih, ((0, 0), (0, H_pad - H))).astype(param_dtype)
    w_hh_p = jnp.pad(w_hh, ((0, H_pad - H), (0, H_pad - H))).astype(param_dtype)
    b_p = jnp.pad(b, ((0, 0), (0, H_pad - H))).astype(jnp.float32)
    w_out_p = jnp.pad(w_out, ((0, H_pad - H), (0, O_pad - O))).astype(param_dtype)
    b_out_p = jnp.pad(b_out, ((0, 0), (0, O_pad - O))).astype(jnp.float32)

    out_p = pl.pallas_call(
        rnn_kernel,
        out_shape=jax.ShapeDtypeStruct((1, B_pad, O_pad), jnp.float32),
        grid_spec=pltpu.PrefetchScalarGridSpec(
            num_scalar_prefetch=0,
            grid=(1,),                              # single step: time loop is in-kernel
            in_specs=[
                pl.BlockSpec((S, B_pad, I), lambda i: (0, 0, 0)),   # x (whole seq)
                pl.BlockSpec((I, H_pad), lambda i: (0, 0)),         # W_ih^T
                pl.BlockSpec((H_pad, H_pad), lambda i: (0, 0)),     # W_hh^T
                pl.BlockSpec((1, H_pad), lambda i: (0, 0)),         # b_ih + b_hh
                pl.BlockSpec((H_pad, O_pad), lambda i: (0, 0)),     # W_out^T
                pl.BlockSpec((1, O_pad), lambda i: (0, 0)),         # b_out
            ],
            out_specs=pl.BlockSpec((1, B_pad, O_pad), lambda i: (0, 0, 0)),
            scratch_shapes=[pltpu.VMEM((S, B_pad, H_pad), jnp.float32)],
        ),
        compiler_params=pltpu.CompilerParams(
            dimension_semantics=("arbitrary",),
            # Explicit VMEM budget (headroom rule for v7x's 64 MiB VMEM if
            # H/S are scaled up); current usage is well under 1 MiB.
            vmem_limit_bytes=32 * 1024 * 1024,
        ),
    )(x_p, w_ih_p, w_hh_p, b_p, w_out_p, b_out_p)

    return out_p[:, :B, :O]


def reference_forward(x, w_ih, w_hh, b, w_out, b_out):
    """Pure-JAX reference matching PyTorch nn.RNN (tanh) + Linear semantics."""
    B = x.shape[1]
    H = w_ih.shape[1]

    def step(h, x_t):
        h_new = jnp.tanh(x_t @ w_ih + h @ w_hh + b)
        return h_new, None

    h0 = jnp.zeros((B, H), jnp.float32)
    h_last, _ = lax.scan(step, h0, x)
    out = h_last @ w_out + b_out
    return out[None]   # [1, B, O]


if __name__ == "__main__":
    # Small shapes consistent with the module's forward: x [src_len, batch, embedding].
    S, B, I, H, O = 8, 4, 16, 32, 8

    key = jax.random.PRNGKey(0)
    kx, k1, k2, k3, k4, k5, k6 = jax.random.split(key, 7)

    # Deterministic parameter init, mimicking PyTorch's U(-1/sqrt(H), 1/sqrt(H)).
    bound = 1.0 / jnp.sqrt(jnp.float32(H))
    w_ih = jax.random.uniform(k1, (I, H), jnp.float32, -bound, bound)   # transposed W_ih
    w_hh = jax.random.uniform(k2, (H, H), jnp.float32, -bound, bound)   # transposed W_hh
    b_ih = jax.random.uniform(k3, (1, H), jnp.float32, -bound, bound)
    b_hh = jax.random.uniform(k4, (1, H), jnp.float32, -bound, bound)
    b = b_ih + b_hh
    w_out = jax.random.uniform(k5, (H, O), jnp.float32, -bound, bound)  # transposed Linear W
    b_out = jax.random.uniform(k6, (1, O), jnp.float32, -bound, bound)

    x = jax.random.normal(kx, (S, B, I), jnp.float32)

    ref = reference_forward(x, w_ih, w_hh, b, w_out, b_out)

    # f32 path: exact-ish match vs. reference.
    out = rnn_model_forward(x, w_ih, w_hh, b, w_out, b_out)
    out = jax.block_until_ready(out)
    assert out.shape == (1, B, O), out.shape
    assert jnp.allclose(out, ref, atol=1e-5, rtol=1e-5), "f32 mismatch vs reference"

    # bf16-weight path (MXU-native on v6e/v7x; f32 accumulate/tanh everywhere).
    out_bf16 = rnn_model_forward(x, w_ih, w_hh, b, w_out, b_out,
                                 param_dtype=jnp.bfloat16)
    out_bf16 = jax.block_until_ready(out_bf16)
    assert out_bf16.shape == (1, B, O), out_bf16.shape
    assert jnp.allclose(out_bf16, ref, atol=5e-2, rtol=5e-2), "bf16 mismatch vs reference"

    print("KERNEL_OK")
</pallas_src>

<mosaic_0001>
module attributes {stable_mosaic.version = 11 : i64} {
  func.func @rnn_kernel(%arg0: i32, %arg1: memref<8x8x16xf32, #tpu.memory_space<vmem>>, %arg2: memref<16x128xf32, #tpu.memory_space<vmem>>, %arg3: memref<128x128xf32, #tpu.memory_space<vmem>>, %arg4: memref<1x128xf32, #tpu.memory_space<vmem>>, %arg5: memref<128x128xf32, #tpu.memory_space<vmem>>, %arg6: memref<1x128xf32, #tpu.memory_space<vmem>>, %arg7: memref<1x8x128xf32, #tpu.memory_space<vmem>>, %arg8: memref<8x8x128xf32, #tpu.memory_space<vmem>>) attributes {dimension_semantics = [#tpu.dimension_semantics<arbitrary>], iteration_bounds = array<i64: 1>, scalar_prefetch = 0 : i64, scratch_operands = 1 : i64, tpu.core_type = #tpu.core_type<tc>, window_params = [{pipeline_mode = #tpu.pipeline_mode<synchronous>, transform_indices = @transform_0, window_bounds = array<i64: 8, 8, 16>}, {pipeline_mode = #tpu.pipeline_mode<synchronous>, transform_indices = @transform_1, window_bounds = array<i64: 16, 128>}, {pipeline_mode = #tpu.pipeline_mode<synchronous>, transform_indices = @transform_2, window_bounds = array<i64: 128, 128>}, {pipeline_mode = #tpu.pipeline_mode<synchronous>, transform_indices = @transform_3, window_bounds = array<i64: 1, 128>}, {pipeline_mode = #tpu.pipeline_mode<synchronous>, transform_indices = @transform_4, window_bounds = array<i64: 128, 128>}, {pipeline_mode = #tpu.pipeline_mode<synchronous>, transform_indices = @transform_5, window_bounds = array<i64: 1, 128>}, {pipeline_mode = #tpu.pipeline_mode<synchronous>, transform_indices = @transform_6, window_bounds = array<i64: 1, 8, 128>}]} {
    %c0 = arith.constant 0 : index
    %c0_0 = arith.constant 0 : index
    %c0_1 = arith.constant 0 : index
    %0 = vector.load %arg1[%c0, %c0_0, %c0_1] : memref<8x8x16xf32, #tpu.memory_space<vmem>>, vector<8x8x16xf32>
    %1 = vector.shape_cast %0 : vector<8x8x16xf32> to vector<64x16xf32>
    %c0_2 = arith.constant 0 : index
    %c0_3 = arith.constant 0 : index
    %2 = vector.load %arg2[%c0_2, %c0_3] : memref<16x128xf32, #tpu.memory_space<vmem>>, vector<16x128xf32>
    %cst = arith.constant dense<0.000000e+00> : vector<64x128xf32>
    %3 = tpu.matmul %1, %2, %cst {dimension_numbers = #tpu.dot_dimension_numbers<[1], [0], [0], [1], [0, 0, 1, 1], [], []>} : vector<64x16xf32>, vector<16x128xf32>, vector<64x128xf32> -> vector<64x128xf32>
    %c0_4 = arith.constant 0 : index
    %c0_5 = arith.constant 0 : index
    %4 = vector.load %arg4[%c0_4, %c0_5] : memref<1x128xf32, #tpu.memory_space<vmem>>, vector<1x128xf32>
    %5 = vector.broadcast %4 : vector<1x128xf32> to vector<64x128xf32>
    %6 = arith.addf %3, %5 : vector<64x128xf32>
    %7 = vector.shape_cast %6 : vector<64x128xf32> to vector<8x8x128xf32>
    %c0_6 = arith.constant 0 : index
    %c0_7 = arith.constant 0 : index
    %c0_8 = arith.constant 0 : index
    %8 = vector.load %arg8[%c0_6, %c0_7, %c0_8] : memref<8x8x128xf32, #tpu.memory_space<vmem>>, vector<8x8x128xf32>
    tpu.vector_store %arg8[%c0_6, %c0_7, %c0_8], %7 {strides = array<i32>} : memref<8x8x128xf32, #tpu.memory_space<vmem>>, vector<8x8x128xf32>,
    %cst_9 = arith.constant 0.000000e+00 : f32
    %9 = vector.broadcast %cst_9 : f32 to vector<8x128xf32>
    %c0_i32 = arith.constant 0 : i32
    %10 = arith.index_cast %c0_i32 : i32 to index
    %c0_10 = arith.constant 0 : index
    %c0_11 = arith.constant 0 : index
    %11 = vector.load %arg8[%10, %c0_10, %c0_11] : memref<8x8x128xf32, #tpu.memory_space<vmem>>, vector<1x8x128xf32>
    %12 = vector.shape_cast %11 : vector<1x8x128xf32> to vector<8x128xf32>
    %c0_12 = arith.constant 0 : index
    %c0_13 = arith.constant 0 : index
    %13 = vector.load %arg3[%c0_12, %c0_13] : memref<128x128xf32, #tpu.memory_space<vmem>>, vector<128x128xf32>
    %cst_14 = arith.constant dense<0.000000e+00> : vector<8x128xf32>
    %14 = tpu.matmul %9, %13, %cst_14 {dimension_numbers = #tpu.dot_dimension_numbers<[1], [0], [0], [1], [0, 0, 1, 1], [], []>} : vector<8x128xf32>, vector<128x128xf32>, vector<8x128xf32> -> vector<8x128xf32>
    %15 = arith.addf %12, %14 : vector<8x128xf32>
    %16 = math.tanh %15 : vector<8x128xf32>
    %c1_i32 = arith.constant 1 : i32
    %17 = arith.index_cast %c1_i32 : i32 to index
    %c0_15 = arith.constant 0 : index
    %c0_16 = arith.constant 0 : index
    %18 = vector.load %arg8[%17, %c0_15, %c0_16] : memref<8x8x128xf32, #tpu.memory_space<vmem>>, vector<1x8x128xf32>
    %19 = vector.shape_cast %18 : vector<1x8x128xf32> to vector<8x128xf32>
    %c0_17 = arith.constant 0 : index
    %c0_18 = arith.constant 0 : index
    %20 = vector.load %arg3[%c0_17, %c0_18] : memref<128x128xf32, #tpu.memory_space<vmem>>, vector<128x128xf32>
    %cst_19 = arith.constant dense<0.000000e+00> : vector<8x128xf32>
    %21 = tpu.matmul %16, %20, %cst_19 {dimension_numbers = #tpu.dot_dimension_numbers<[1], [0], [0], [1], [0, 0, 1, 1], [], []>} : vector<8x128xf32>, vector<128x128xf32>, vector<8x128xf32> -> vector<8x128xf32>
    %22 = arith.addf %19, %21 : vector<8x128xf32>
    %23 = math.tanh %22 : vector<8x128xf32>
    %c2_i32 = arith.constant 2 : i32
    %24 = arith.index_cast %c2_i32 : i32 to index
    %c0_20 = arith.constant 0 : index
    %c0_21 = arith.constant 0 : index
    %25 = vector.load %arg8[%24, %c0_20, %c0_21] : memref<8x8x128xf32, #tpu.memory_space<vmem>>, vector<1x8x128xf32>
    %26 = vector.shape_cast %25 : vector<1x8x128xf32> to vector<8x128xf32>
    %c0_22 = arith.constant 0 : index
    %c0_23 = arith.constant 0 : index
    %27 = vector.load %arg3[%c0_22, %c0_23] : memref<128x128xf32, #tpu.memory_space<vmem>>, vector<128x128xf32>
    %cst_24 = arith.constant dense<0.000000e+00> : vector<8x128xf32>
    %28 = tpu.matmul %23, %27, %cst_24 {dimension_numbers = #tpu.dot_dimension_numbers<[1], [0], [0], [1], [0, 0, 1, 1], [], []>} : vector<8x128xf32>, vector<128x128xf32>, vector<8x128xf32> -> vector<8x128xf32>
    %29 = arith.addf %26, %28 : vector<8x128xf32>
    %30 = math.tanh %29 : vector<8x128xf32>
    %c3_i32 = arith.constant 3 : i32
    %31 = arith.index_cast %c3_i32 : i32 to index
    %c0_25 = arith.constant 0 : index
    %c0_26 = arith.constant 0 : index
    %32 = vector.load %arg8[%31, %c0_25, %c0_26] : memref<8x8x128xf32, #tpu.memory_space<vmem>>, vector<1x8x128xf32>
    %33 = vector.shape_cast %32 : vector<1x8x128xf32> to vector<8x128xf32>
    %c0_27 = arith.constant 0 : index
    %c0_28 = arith.constant 0 : index
    %34 = vector.load %arg3[%c0_27, %c0_28] : memref<128x128xf32, #tpu.memory_space<vmem>>, vector<128x128xf32>
    %cst_29 = arith.constant dense<0.000000e+00> : vector<8x128xf32>
    %35 = tpu.matmul %30, %34, %cst_29 {dimension_numbers = #tpu.dot_dimension_numbers<[1], [0], [0], [1], [0, 0, 1, 1], [], []>} : vector<8x128xf32>, vector<128x128xf32>, vector<8x128xf32> -> vector<8x128xf32>
    %36 = arith.addf %33, %35 : vector<8x128xf32>
    %37 = math.tanh %36 : vector<8x128xf32>
    %c4_i32 = arith.constant 4 : i32
    %38 = arith.index_cast %c4_i32 : i32 to index
    %c0_30 = arith.constant 0 : index
    %c0_31 = arith.constant 0 : index
    %39 = vector.load %arg8[%38, %c0_30, %c0_31] : memref<8x8x128xf32, #tpu.memory_space<vmem>>, vector<1x8x128xf32>
    %40 = vector.shape_cast %39 : vector<1x8x128xf32> to vector<8x128xf32>
    %c0_32 = arith.constant 0 : index
    %c0_33 = arith.constant 0 : index
    %41 = vector.load %arg3[%c0_32, %c0_33] : memref<128x128xf32, #tpu.memory_space<vmem>>, vector<128x128xf32>
    %cst_34 = arith.constant dense<0.000000e+00> : vector<8x128xf32>
    %42 = tpu.matmul %37, %41, %cst_34 {dimension_numbers = #tpu.dot_dimension_numbers<[1], [0], [0], [1], [0, 0, 1, 1], [], []>} : vector<8x128xf32>, vector<128x128xf32>, vector<8x128xf32> -> vector<8x128xf32>
    %43 = arith.addf %40, %42 : vector<8x128xf32>
    %44 = math.tanh %43 : vector<8x128xf32>
    %c5_i32 = arith.constant 5 : i32
    %45 = arith.index_cast %c5_i32 : i32 to index
    %c0_35 = arith.constant 0 : index
    %c0_36 = arith.constant 0 : index
    %46 = vector.load %arg8[%45, %c0_35, %c0_36] : memref<8x8x128xf32, #tpu.memory_space<vmem>>, vector<1x8x128xf32>
    %47 = vector.shape_cast %46 : vector<1x8x128xf32> to vector<8x128xf32>
    %c0_37 = arith.constant 0 : index
    %c0_38 = arith.constant 0 : index
    %48 = vector.load %arg3[%c0_37, %c0_38] : memref<128x128xf32, #tpu.memory_space<vmem>>, vector<128x128xf32>
    %cst_39 = arith.constant dense<0.000000e+00> : vector<8x128xf32>
    %49 = tpu.matmul %44, %48, %cst_39 {dimension_numbers = #tpu.dot_dimension_numbers<[1], [0], [0], [1], [0, 0, 1, 1], [], []>} : vector<8x128xf32>, vector<128x128xf32>, vector<8x128xf32> -> vector<8x128xf32>
    %50 = arith.addf %47, %49 : vector<8x128xf32>
    %51 = math.tanh %50 : vector<8x128xf32>
    %c6_i32 = arith.constant 6 : i32
    %52 = arith.index_cast %c6_i32 : i32 to index
    %c0_40 = arith.constant 0 : index
    %c0_41 = arith.constant 0 : index
    %53 = vector.load %arg8[%52, %c0_40, %c0_41] : memref<8x8x128xf32, #tpu.memory_space<vmem>>, vector<1x8x128xf32>
    %54 = vector.shape_cast %53 : vector<1x8x128xf32> to vector<8x128xf32>
    %c0_42 = arith.constant 0 : index
    %c0_43 = arith.constant 0 : index
    %55 = vector.load %arg3[%c0_42, %c0_43] : memref<128x128xf32, #tpu.memory_space<vmem>>, vector<128x128xf32>
    %cst_44 = arith.constant dense<0.000000e+00> : vector<8x128xf32>
    %56 = tpu.matmul %51, %55, %cst_44 {dimension_numbers = #tpu.dot_dimension_numbers<[1], [0], [0], [1], [0, 0, 1, 1], [], []>} : vector<8x128xf32>, vector<128x128xf32>, vector<8x128xf32> -> vector<8x128xf32>
    %57 = arith.addf %54, %56 : vector<8x128xf32>
    %58 = math.tanh %57 : vector<8x128xf32>
    %c7_i32 = arith.constant 7 : i32
    %59 = arith.index_cast %c7_i32 : i32 to index
    %c0_45 = arith.constant 0 : index
    %c0_46 = arith.constant 0 : index
    %60 = vector.load %arg8[%59, %c0_45, %c0_46] : memref<8x8x128xf32, #tpu.memory_space<vmem>>, vector<1x8x128xf32>
    %61 = vector.shape_cast %60 : vector<1x8x128xf32> to vector<8x128xf32>
    %c0_47 = arith.constant 0 : index
    %c0_48 = arith.constant 0 : index
    %62 = vector.load %arg3[%c0_47, %c0_48] : memref<128x128xf32, #tpu.memory_space<vmem>>, vector<128x128xf32>
    %cst_49 = arith.constant dense<0.000000e+00> : vector<8x128xf32>
    %63 = tpu.matmul %58, %62, %cst_49 {dimension_numbers = #tpu.dot_dimension_numbers<[1], [0], [0], [1], [0, 0, 1, 1], [], []>} : vector<8x128xf32>, vector<128x128xf32>, vector<8x128xf32> -> vector<8x128xf32>
    %64 = arith.addf %61, %63 : vector<8x128xf32>
    %65 = math.tanh %64 : vector<8x128xf32>
    %c8_i32 = arith.constant 8 : i32
    %c0_50 = arith.constant 0 : index
    %c0_51 = arith.constant 0 : index
    %66 = vector.load %arg5[%c0_50, %c0_51] : memref<128x128xf32, #tpu.memory_space<vmem>>, vector<128x128xf32>
    %cst_52 = arith.constant dense<0.000000e+00> : vector<8x128xf32>
    %67 = tpu.matmul %65, %66, %cst_52 {dimension_numbers = #tpu.dot_dimension_numbers<[1], [0], [0], [1], [0, 0, 1, 1], [], []>} : vector<8x128xf32>, vector<128x128xf32>, vector<8x128xf32> -> vector<8x128xf32>
    %c0_53 = arith.constant 0 : index
    %c0_54 = arith.constant 0 : index
    %68 = vector.load %arg6[%c0_53, %c0_54] : memref<1x128xf32, #tpu.memory_space<vmem>>, vector<1x128xf32>
    %69 = vector.broadcast %68 : vector<1x128xf32> to vector<8x128xf32>
    %70 = arith.addf %67, %69 : vector<8x128xf32>
    %c0_55 = arith.constant 0 : index
    %c0_56 = arith.constant 0 : index
    %c0_57 = arith.constant 0 : index
    %71 = vector.load %arg7[%c0_55, %c0_56, %c0_57] : memref<1x8x128xf32, #tpu.memory_space<vmem>>, vector<1x8x128xf32>
    %72 = vector.shape_cast %71 : vector<1x8x128xf32> to vector<8x128xf32>
    %73 = vector.shape_cast %70 : vector<8x128xf32> to vector<1x8x128xf32>
    tpu.vector_store %arg7[%c0_55, %c0_56, %c0_57], %73 {strides = array<i32>} : memref<1x8x128xf32, #tpu.memory_space<vmem>>, vector<1x8x128xf32>,
    return
  }
  func.func @transform_0(%arg0: i32) -> (i32, i32, i32) {
    %c0_i32 = arith.constant 0 : i32
    %c0_i32_0 = arith.constant 0 : i32
    %c0_i32_1 = arith.constant 0 : i32
    %c0_i32_2 = arith.constant 0 : i32
    return %c0_i32, %c0_i32_0, %c0_i32_1 : i32, i32, i32
  }
  func.func @transform_1(%arg0: i32) -> (i32, i32) {
    %c0_i32 = arith.constant 0 : i32
    %c0_i32_0 = arith.constant 0 : i32
    %c0_i32_1 = arith.constant 0 : i32
    return %c0_i32, %c0_i32_0 : i32, i32
  }
  func.func @transform_2(%arg0: i32) -> (i32, i32) {
    %c0_i32 = arith.constant 0 : i32
    %c0_i32_0 = arith.constant 0 : i32
    %c0_i32_1 = arith.constant 0 : i32
    return %c0_i32, %c0_i32_0 : i32, i32
  }
  func.func @transform_3(%arg0: i32) -> (i32, i32) {
    %c0_i32 = arith.constant 0 : i32
    %c0_i32_0 = arith.constant 0 : i32
    %c0_i32_1 = arith.constant 0 : i32
    return %c0_i32, %c0_i32_0 : i32, i32
  }
  func.func @transform_4(%arg0: i32) -> (i32, i32) {
    %c0_i32 = arith.constant 0 : i32
    %c0_i32_0 = arith.constant 0 : i32
    %c0_i32_1 = arith.constant 0 : i32
    return %c0_i32, %c0_i32_0 : i32, i32
  }
  func.func @transform_5(%arg0: i32) -> (i32, i32) {
    %c0_i32 = arith.constant 0 : i32
    %c0_i32_0 = arith.constant 0 : i32
    %c0_i32_1 = arith.constant 0 : i32
    return %c0_i32, %c0_i32_0 : i32, i32
  }
  func.func @transform_6(%arg0: i32) -> (i32, i32, i32) {
    %c0_i32 = arith.constant 0 : i32
    %c0_i32_0 = arith.constant 0 : i32
    %c0_i32_1 = arith.constant 0 : i32
    %c0_i32_2 = arith.constant 0 : i32
    return %c0_i32, %c0_i32_0, %c0_i32_1 : i32, i32, i32
  }
}

</mosaic_0001>

<llo_original>
// kernel: tpu_custom_call.1
$region0: #{tpu_custom_call.1}
  #allocation0 [shape = 'u32[]', space=smem, size = 0x4, offset = 0x4, fixed_abs, tag = 'smem constant byte address 0x4 - core index']
  #allocation1 [shape = 'u32[72,128]{1,0:T(1,128)}', space=vmem, size = 0x9000, scoped, tag = 'internal scratch']
  #allocation2 [shape = 'f32[8,8,128]{2,1,0:T(8,128)}', space=vmem, size = 0x8000, scoped, tag = 'scratch operand']
  %s0 = inlined_call_operand.hbm [shape: f32[8,8,16], index: 0, kind: input, shape index: {}]
  %s1 = inlined_call_operand.hbm [shape: f32[16,128], index: 1, kind: input, shape index: {}]
  %s2 = inlined_call_operand.hbm [shape: f32[128,128], index: 2, kind: input, shape index: {}]
  %s3 = inlined_call_operand.vmem [shape: f32[1,128], index: 3, kind: input, shape index: {}]
  %s4 = inlined_call_operand.hbm [shape: f32[128,128], index: 4, kind: input, shape index: {}]
  %s5 = inlined_call_operand.vmem [shape: f32[1,128], index: 5, kind: input, shape index: {}]
  %s6 = inlined_call_operand.hbm [shape: f32[1,8,128], index: 6, kind: output, shape index: {}]
  %s7 = sld [smem:[#allocation0]]
  $region50: #{tpu_custom_call.1} parent=0
    _
  %s9 = ssub.s32 1, %s7
  %s10 = scalar_select 0, %s9, %s7
  $region1: #{tpu_custom_call.1} parent=0
    #allocation3 [shape = 'u8[32768]{0}', space=vmem, size = 0x8000, scoped, tag = 'input window, operand 0, single buffered']
    #allocation4 [shape = 's32[1]{0}', space=sflag, size = 0x4, scoped, tag = 'scoped memory for tpu_custom_call.1']
    #allocation5 [shape = 's32[1]{0}', space=sflag, size = 0x4, scoped, tag = 'scoped memory for tpu_custom_call.1']
    #allocation6 [shape = 'u8[8192]{0}', space=vmem, size = 0x2000, scoped, tag = 'input window, operand 1, single buffered']
    #allocation7 [shape = 's32[1]{0}', space=sflag, size = 0x4, scoped, tag = 'scoped memory for tpu_custom_call.1']
    #allocation8 [shape = 'u8[65536]{0}', space=vmem, size = 0x10000, scoped, tag = 'input window, operand 2, single buffered']
    #allocation9 [shape = 'u8[65536]{0}', space=vmem, size = 0x10000, scoped, tag = 'input window, operand 4, single buffered']
    #allocation10 [shape = 's32[1]{0}', space=sflag, size = 0x4, scoped, tag = 'scoped memory for tpu_custom_call.1']
    #allocation11 [shape = 'u8[4096]{0}', space=vmem, size = 0x1000, scoped, tag = 'output window, operand 0, single buffered']
    %11 = vsyncpa [#allocation4], 0
    %12 = vsyncpa [#allocation7], 0
    %13 = vsyncpa [#allocation10], 0
    %14 = vsyncpa [#allocation5], 0
    // Predicated region
    $region2: #{tpu_custom_call.1} parent=1 // pred_check
      _
    $region3: #{tpu_custom_call.1} parent=1 // pred_check_branch
      %16 = sbr.rel (0) target = $region5
    $region4: #{tpu_custom_call.1} parent=1 // pred_region
      %18 = vsyncadd [#allocation4], 0
      %s19 = sshll.u32 %s0, 4
      %s20 = int_to_ptr.hbm [resolvable:$true] %s19
      %s21 = sshll.u32 [#allocation3], 4
      %s22 = int_to_ptr.vmem [resolvable:$true] %s21
      %27 = dma.hbm_to_vmem [thread:$0]  %s20, 1024, %s22, [#allocation4], 128, 128, 8
    $region5: #{tpu_custom_call.1} parent=1 // pred_fallthru
      _
    // Predicated region
    $region6: #{tpu_custom_call.1} parent=1 // pred_check
      _
    $region7: #{tpu_custom_call.1} parent=1 // pred_check_branch
      %29 = sbr.rel (0) target = $region9
    $region8: #{tpu_custom_call.1} parent=1 // pred_region
      %31 = vsyncadd [#allocation7], 0
      %s32 = sshll.u32 %s1, 4
      %s33 = int_to_ptr.hbm [resolvable:$true] %s32
      %s34 = sshll.u32 [#allocation6], 4
      %s35 = int_to_ptr.vmem [resolvable:$true] %s34
      %40 = dma.hbm_to_vmem [thread:$0]  %s33, 256, %s35, [#allocation7], 128, 128, 8
    $region9: #{tpu_custom_call.1} parent=1 // pred_fallthru
      _
    // Predicated region
    $region10: #{tpu_custom_call.1} parent=1 // pred_check
      _
    $region11: #{tpu_custom_call.1} parent=1 // pred_check_branch
      %42 = sbr.rel (0) target = $region13
    $region12: #{tpu_custom_call.1} parent=1 // pred_region
      %44 = vsyncadd [#allocation7], 0
      %s45 = sshll.u32 %s2, 4
      %s46 = int_to_ptr.hbm [resolvable:$true] %s45
      %s47 = sshll.u32 [#allocation8], 4
      %s48 = int_to_ptr.vmem [resolvable:$true] %s47
      %53 = dma.hbm_to_vmem [thread:$0]  %s46, 2048, %s48, [#allocation7], 128, 128, 8
    $region13: #{tpu_custom_call.1} parent=1 // pred_fallthru
      _
    // Predicated region
    $region14: #{tpu_custom_call.1} parent=1 // pred_check
      _
    $region15: #{tpu_custom_call.1} parent=1 // pred_check_branch
      %55 = sbr.rel (0) target = $region17
    $region16: #{tpu_custom_call.1} parent=1 // pred_region
      _
    $region17: #{tpu_custom_call.1} parent=1 // pred_fallthru
      _
    // Predicated region
    $region18: #{tpu_custom_call.1} parent=1 // pred_check
      _
    $region19: #{tpu_custom_call.1} parent=1 // pred_check_branch
      %57 = sbr.rel (0) target = $region21
    $region20: #{tpu_custom_call.1} parent=1 // pred_region
      %59 = vsyncadd [#allocation10], 0
      %s60 = sshll.u32 %s4, 4
      %s61 = int_to_ptr.hbm [resolvable:$true] %s60
      %s62 = sshll.u32 [#allocation9], 4
      %s63 = int_to_ptr.vmem [resolvable:$true] %s62
      %68 = dma.hbm_to_vmem [thread:$0]  %s61, 2048, %s63, [#allocation10], 128, 128, 8
    $region21: #{tpu_custom_call.1} parent=1 // pred_fallthru
      _
    // Predicated region
    $region22: #{tpu_custom_call.1} parent=1 // pred_check
      _
    $region23: #{tpu_custom_call.1} parent=1 // pred_check_branch
      %70 = sbr.rel (0) target = $region25
    $region24: #{tpu_custom_call.1} parent=1 // pred_region
      _
    $region25: #{tpu_custom_call.1} parent=1 // pred_fallthru
      _
    // Predicated region
    $region26: #{tpu_custom_call.1} parent=1 // pred_check
      _
    $region27: #{tpu_custom_call.1} parent=1 // pred_check_branch
      %72 = sbr.rel (0) target = $region29
    $region28: #{tpu_custom_call.1} parent=1 // pred_region
      %74 = dma.done [#allocation4], 1024
    $region29: #{tpu_custom_call.1} parent=1 // pred_fallthru
      _
    // Predicated region
    $region30: #{tpu_custom_call.1} parent=1 // pred_check
      _
    $region31: #{tpu_custom_call.1} parent=1 // pred_check_branch
      %76 = sbr.rel (0) target = $region33
    $region32: #{tpu_custom_call.1} parent=1 // pred_region
      %78 = dma.done [#allocation7], 256
    $region33: #{tpu_custom_call.1} parent=1 // pred_fallthru
      _
    // Predicated region
    $region34: #{tpu_custom_call.1} parent=1 // pred_check
      _
    $region35: #{tpu_custom_call.1} parent=1 // pred_check_branch
      %80 = sbr.rel (0) target = $region37
    $region36: #{tpu_custom_call.1} parent=1 // pred_region
      %82 = dma.done [#allocation7], 2048
    $region37: #{tpu_custom_call.1} parent=1 // pred_fallthru
      _
    // Predicated region
    $region38: #{tpu_custom_call.1} parent=1 // pred_check
      _
    $region39: #{tpu_custom_call.1} parent=1 // pred_check_branch
      %84 = sbr.rel (0) target = $region41
    $region40: #{tpu_custom_call.1} parent=1 // pred_region
      %86 = dma.done [#allocation10], 2048
    $region41: #{tpu_custom_call.1} parent=1 // pred_fallthru
      _
    %v87 = vld [vmem:[#allocation3] sm:$0xff]
    %v88 = vld [vmem:[#allocation3 + $0x8] sm:$0xff]
    %v89 = vld [vmem:[#allocation3 + $0x10] sm:$0xff]
    %v90 = vld [vmem:[#allocation3 + $0x18] sm:$0xff]
    %v91 = vld [vmem:[#allocation3 + $0x20] sm:$0xff]
    %v92 = vld [vmem:[#allocation3 + $0x28] sm:$0xff]
    %v93 = vld [vmem:[#allocation3 + $0x30] sm:$0xff]
    %v94 = vld [vmem:[#allocation3 + $0x38] sm:$0xff]
    %v95 = vld [vmem:[#allocation6] sm:$0xff]
    %v96 = vld [vmem:[#allocation6 + $0x8] sm:$0xff]
    %v97 = vld [vmem:[%s3] sm:$0x1]
    %v99 = vperm.slane %v97, 0
    %vm101 = vcmask 130048
    %v103 = vsel %vm101, %v87, 0
    %v106 = vsel %vm101, %v88, 0
    %v109 = vsel %vm101, %v89, 0
    %v112 = vsel %vm101, %v90, 0
    %v115 = vsel %vm101, %v91, 0
    %v118 = vsel %vm101, %v92, 0
    %v121 = vsel %vm101, %v93, 0
    %v124 = vsel %vm101, %v94, 0
    %126 = vmatpush.msra.mxu0 0.0
    %127 = vmatpush.msra.mxu0 0.0
    %128 = vmatpush.msra.mxu0 0.0
    %129 = vmatpush.msra.mxu0 0.0
    %130 = vmatpush.msra.mxu0 0.0
    %131 = vmatpush.msra.mxu0 0.0
    %132 = vmatpush.msra.mxu0 0.0
    %133 = vmatpush.msra.mxu0 0.0
    %134 = vmatpush.msra.mxu0 0.0
    %135 = vmatpush.msra.mxu0 0.0
    %136 = vmatpush.msra.mxu0 0.0
    %137 = vmatpush.msra.mxu0 0.0
    %138 = vmatpush.msra.mxu0 0.0
    %139 = vmatpush.msra.mxu0 0.0
    %140 = vmatpush.msra.mxu0 %v96
    %141 = vmatpush.msra.mxu0 %v95
    %142 = vmatmul.f32.gmra.mxu0 %v103
    %v143 = vpop.f32.mrf.mxu0
    %v144 = vadd.f32 %v99, %v143
    %145 = vmatmul.f32.gmra.mxu0 %v106
    %v146 = vpop.f32.mrf.mxu0
    %v147 = vadd.f32 %v99, %v146
    %148 = vmatmul.f32.gmra.mxu0 %v109
    %v149 = vpop.f32.mrf.mxu0
    %v150 = vadd.f32 %v99, %v149
    %151 = vmatmul.f32.gmra.mxu0 %v112
    %v152 = vpop.f32.mrf.mxu0
    %v153 = vadd.f32 %v99, %v152
    %154 = vmatmul.f32.gmra.mxu0 %v115
    %v155 = vpop.f32.mrf.mxu0
    %v156 = vadd.f32 %v99, %v155
    %157 = vmatmul.f32.gmra.mxu0 %v118
    %v158 = vpop.f32.mrf.mxu0
    %v159 = vadd.f32 %v99, %v158
    %160 = vmatmul.f32.gmra.mxu0 %v121
    %v161 = vpop.f32.mrf.mxu0
    %v162 = vadd.f32 %v99, %v161
    %163 = vmatmul.f32.gmra.mxu0 %v124
    %v164 = vpop.f32.mrf.mxu0
    %v165 = vadd.f32 %v99, %v164
    %166 = vdwg.mxu0
    %167 = vst [vmem:[#allocation2] sm:$0xff] %v144
    %168 = vst [vmem:[#allocation2 + $0x8] sm:$0xff] %v147
    %169 = vst [vmem:[#allocation2 + $0x10] sm:$0xff] %v150
    %170 = vst [vmem:[#allocation2 + $0x18] sm:$0xff] %v153
    %171 = vst [vmem:[#allocation2 + $0x20] sm:$0xff] %v156
    %172 = vst [vmem:[#allocation2 + $0x28] sm:$0xff] %v159
    %173 = vst [vmem:[#allocation2 + $0x30] sm:$0xff] %v162
    %174 = vst [vmem:[#allocation2 + $0x38] sm:$0xff] %v165
    %v175 = vld [vmem:[#allocation2] sm:$0xff]
    %v176 = vld [vmem:[#allocation8] sm:$0xff]
    %v177 = vld [vmem:[#allocation8 + $0x8] sm:$0xff]
    %v178 = vld [vmem:[#allocation8 + $0x10] sm:$0xff]
    %v179 = vld [vmem:[#allocation8 + $0x18] sm:$0xff]
    %v180 = vld [vmem:[#allocation8 + $0x20] sm:$0xff]
    %v181 = vld [vmem:[#allocation8 + $0x28] sm:$0xff]
    %v182 = vld [vmem:[#allocation8 + $0x30] sm:$0xff]
    %v183 = vld [vmem:[#allocation8 + $0x38] sm:$0xff]
    %v184 = vld [vmem:[#allocation8 + $0x40] sm:$0xff]
    %v185 = vld [vmem:[#allocation8 + $0x48] sm:$0xff]
    %v186 = vld [vmem:[#allocation8 + $0x50] sm:$0xff]
    %v187 = vld [vmem:[#allocation8 + $0x58] sm:$0xff]
    %v188 = vld [vmem:[#allocation8 + $0x60] sm:$0xff]
    %v189 = vld [vmem:[#allocation8 + $0x68] sm:$0xff]
    %v190 = vld [vmem:[#allocation8 + $0x70] sm:$0xff]
    %v191 = vld [vmem:[#allocation8 + $0x78] sm:$0xff]
    %192 = vmatpush.msra.mxu0 %v191
    %193 = vmatpush.msra.mxu0 %v190
    %194 = vmatpush.msra.mxu0 %v189
    %195 = vmatpush.msra.mxu0 %v188
    %196 = vmatpush.msra.mxu0 %v187
    %197 = vmatpush.msra.mxu0 %v186
    %198 = vmatpush.msra.mxu0 %v185
    %199 = vmatpush.msra.mxu0 %v184
    %200 = vmatpush.msra.mxu0 %v183
    %201 = vmatpush.msra.mxu0 %v182
    %202 = vmatpush.msra.mxu0 %v181
    %203 = vmatpush.msra.mxu0 %v180
    %204 = vmatpush.msra.mxu0 %v179
    %205 = vmatpush.msra.mxu0 %v178
    %206 = vmatpush.msra.mxu0 %v177
    %207 = vmatpush.msra.mxu0 %v176
    %208 = vmatmul.f32.gmra.mxu0 0.0
    %v209 = vpop.f32.mrf.mxu0
    %v210 = vadd.f32 0.0, %v209
    %211 = vdwg.mxu0
    %v212 = vadd.f32 %v175, %v210
    %v213 = vtanh.pop %v212
    %s214 = scalar_lea.vmem [#allocation2], 8
    %v215 = vld [vmem:[%s214] sm:$0xff]
    %216 = vmatpush.msra.mxu0 %v191
    %217 = vmatpush.msra.mxu0 %v190
    %218 = vmatpush.msra.mxu0 %v189
    %219 = vmatpush.msra.mxu0 %v188
    %220 = vmatpush.msra.mxu0 %v187
    %221 = vmatpush.msra.mxu0 %v186
    %222 = vmatpush.msra.mxu0 %v185
    %223 = vmatpush.msra.mxu0 %v184
    %224 = vmatpush.msra.mxu0 %v183
    %225 = vmatpush.msra.mxu0 %v182
    %226 = vmatpush.msra.mxu0 %v181
    %227 = vmatpush.msra.mxu0 %v180
    %228 = vmatpush.msra.mxu0 %v179
    %229 = vmatpush.msra.mxu0 %v178
    %230 = vmatpush.msra.mxu0 %v177
    %231 = vmatpush.msra.mxu0 %v176
    %232 = vmatmul.f32.gmra.mxu0 %v213
    %v233 = vpop.f32.mrf.mxu0
    %v234 = vadd.f32 0.0, %v233
    %235 = vdwg.mxu0
    %v236 = vadd.f32 %v215, %v234
    %v237 = vtanh.pop %v236
    %s238 = scalar_lea.vmem [#allocation2], 16
    %v239 = vld [vmem:[%s238] sm:$0xff]
    %240 = vmatpush.msra.mxu0 %v191
    %241 = vmatpush.msra.mxu0 %v190
    %242 = vmatpush.msra.mxu0 %v189
    %243 = vmatpush.msra.mxu0 %v188
    %244 = vmatpush.msra.mxu0 %v187
    %245 = vmatpush.msra.mxu0 %v186
    %246 = vmatpush.msra.mxu0 %v185
    %247 = vmatpush.msra.mxu0 %v184
    %248 = vmatpush.msra.mxu0 %v183
    %249 = vmatpush.msra.mxu0 %v182
    %250 = vmatpush.msra.mxu0 %v181
    %251 = vmatpush.msra.mxu0 %v180
    %252 = vmatpush.msra.mxu0 %v179
    %253 = vmatpush.msra.mxu0 %v178
    %254 = vmatpush.msra.mxu0 %v177
    %255 = vmatpush.msra.mxu0 %v176
    %256 = vmatmul.f32.gmra.mxu0 %v237
    %v257 = vpop.f32.mrf.mxu0
    %v258 = vadd.f32 0.0, %v257
    %259 = vdwg.mxu0
    %v260 = vadd.f32 %v239, %v258
    %v261 = vtanh.pop %v260
    %s262 = scalar_lea.vmem [#allocation2], 24
    %v263 = vld [vmem:[%s262] sm:$0xff]
    %264 = vmatpush.msra.mxu0 %v191
    %265 = vmatpush.msra.mxu0 %v190
    %266 = vmatpush.msra.mxu0 %v189
    %267 = vmatpush.msra.mxu0 %v188
    %268 = vmatpush.msra.mxu0 %v187
    %269 = vmatpush.msra.mxu0 %v186
    %270 = vmatpush.msra.mxu0 %v185
    %271 = vmatpush.msra.mxu0 %v184
    %272 = vmatpush.msra.mxu0 %v183
    %273 = vmatpush.msra.mxu0 %v182
    %274 = vmatpush.msra.mxu0 %v181
    %275 = vmatpush.msra.mxu0 %v180
    %276 = vmatpush.msra.mxu0 %v179
    %277 = vmatpush.msra.mxu0 %v178
    %278 = vmatpush.msra.mxu0 %v177
    %279 = vmatpush.msra.mxu0 %v176
    %280 = vmatmul.f32.gmra.mxu0 %v261
    %v281 = vpop.f32.mrf.mxu0
    %v282 = vadd.f32 0.0, %v281
    %283 = vdwg.mxu0
    %v284 = vadd.f32 %v263, %v282
    %v285 = vtanh.pop %v284
    %s286 = scalar_lea.vmem [#allocation2], 32
    %v287 = vld [vmem:[%s286] sm:$0xff]
    %288 = vmatpush.msra.mxu0 %v191
    %289 = vmatpush.msra.mxu0 %v190
    %290 = vmatpush.msra.mxu0 %v189
    %291 = vmatpush.msra.mxu0 %v188
    %292 = vmatpush.msra.mxu0 %v187
    %293 = vmatpush.msra.mxu0 %v186
    %294 = vmatpush.msra.mxu0 %v185
    %295 = vmatpush.msra.mxu0 %v184
    %296 = vmatpush.msra.mxu0 %v183
    %297 = vmatpush.msra.mxu0 %v182
    %298 = vmatpush.msra.mxu0 %v181
    %299 = vmatpush.msra.mxu0 %v180
    %300 = vmatpush.msra.mxu0 %v179
    %301 = vmatpush.msra.mxu0 %v178
    %302 = vmatpush.msra.mxu0 %v177
    %303 = vmatpush.msra.mxu0 %v176
    %304 = vmatmul.f32.gmra.mxu0 %v285
    %v305 = vpop.f32.mrf.mxu0
    %v306 = vadd.f32 0.0, %v305
    %307 = vdwg.mxu0
    %v308 = vadd.f32 %v287, %v306
    %v309 = vtanh.pop %v308
    %s310 = scalar_lea.vmem [#allocation2], 40
    %v311 = vld [vmem:[%s310] sm:$0xff]
    %312 = vmatpush.msra.mxu0 %v191
    %313 = vmatpush.msra.mxu0 %v190
    %314 = vmatpush.msra.mxu0 %v189
    %315 = vmatpush.msra.mxu0 %v188
    %316 = vmatpush.msra.mxu0 %v187
    %317 = vmatpush.msra.mxu0 %v186
    %318 = vmatpush.msra.mxu0 %v185
    %319 = vmatpush.msra.mxu0 %v184
    %320 = vmatpush.msra.mxu0 %v183
    %321 = vmatpush.msra.mxu0 %v182
    %322 = vmatpush.msra.mxu0 %v181
    %323 = vmatpush.msra.mxu0 %v180
    %324 = vmatpush.msra.mxu0 %v179
    %325 = vmatpush.msra.mxu0 %v178
    %326 = vmatpush.msra.mxu0 %v177
    %327 = vmatpush.msra.mxu0 %v176
    %328 = vmatmul.f32.gmra.mxu0 %v309
    %v329 = vpop.f32.mrf.mxu0
    %v330 = vadd.f32 0.0, %v329
    %331 = vdwg.mxu0
    %v332 = vadd.f32 %v311, %v330
    %v333 = vtanh.pop %v332
    %s334 = scalar_lea.vmem [#allocation2], 48
    %v335 = vld [vmem:[%s334] sm:$0xff]
    %336 = vmatpush.msra.mxu0 %v191
    %337 = vmatpush.msra.mxu0 %v190
    %338 = vmatpush.msra.mxu0 %v189
    %339 = vmatpush.msra.mxu0 %v188
    %340 = vmatpush.msra.mxu0 %v187
    %341 = vmatpush.msra.mxu0 %v186
    %342 = vmatpush.msra.mxu0 %v185
    %343 = vmatpush.msra.mxu0 %v184
    %344 = vmatpush.msra.mxu0 %v183
    %345 = vmatpush.msra.mxu0 %v182
    %346 = vmatpush.msra.mxu0 %v181
    %347 = vmatpush.msra.mxu0 %v180
    %348 = vmatpush.msra.mxu0 %v179
    %349 = vmatpush.msra.mxu0 %v178
    %350 = vmatpush.msra.mxu0 %v177
    %351 = vmatpush.msra.mxu0 %v176
    %352 = vmatmul.f32.gmra.mxu0 %v333
    %v353 = vpop.f32.mrf.mxu0
    %v354 = vadd.f32 0.0, %v353
    %355 = vdwg.mxu0
    %v356 = vadd.f32 %v335, %v354
    %v357 = vtanh.pop %v356
    %s358 = scalar_lea.vmem [#allocation2], 56
    %v359 = vld [vmem:[%s358] sm:$0xff]
    %360 = vmatpush.msra.mxu0 %v191
    %361 = vmatpush.msra.mxu0 %v190
    %362 = vmatpush.msra.mxu0 %v189
    %363 = vmatpush.msra.mxu0 %v188
    %364 = vmatpush.msra.mxu0 %v187
    %365 = vmatpush.msra.mxu0 %v186
    %366 = vmatpush.msra.mxu0 %v185
    %367 = vmatpush.msra.mxu0 %v184
    %368 = vmatpush.msra.mxu0 %v183
    %369 = vmatpush.msra.mxu0 %v182
    %370 = vmatpush.msra.mxu0 %v181
    %371 = vmatpush.msra.mxu0 %v180
    %372 = vmatpush.msra.mxu0 %v179
    %373 = vmatpush.msra.mxu0 %v178
    %374 = vmatpush.msra.mxu0 %v177
    %375 = vmatpush.msra.mxu0 %v176
    %376 = vmatmul.f32.gmra.mxu0 %v357
    %v377 = vpop.f32.mrf.mxu0
    %v378 = vadd.f32 0.0, %v377
    %379 = vdwg.mxu0
    %v380 = vadd.f32 %v359, %v378
    %v381 = vtanh.pop %v380
    %v382 = vld [vmem:[#allocation9] sm:$0xff]
    %v383 = vld [vmem:[#allocation9 + $0x8] sm:$0xff]
    %v384 = vld [vmem:[#allocation9 + $0x10] sm:$0xff]
    %v385 = vld [vmem:[#allocation9 + $0x18] sm:$0xff]
    %v386 = vld [vmem:[#allocation9 + $0x20] sm:$0xff]
    %v387 = vld [vmem:[#allocation9 + $0x28] sm:$0xff]
    %v388 = vld [vmem:[#allocation9 + $0x30] sm:$0xff]
    %v389 = vld [vmem:[#allocation9 + $0x38] sm:$0xff]
    %v390 = vld [vmem:[#allocation9 + $0x40] sm:$0xff]
    %v391 = vld [vmem:[#allocation9 + $0x48] sm:$0xff]
    %v392 = vld [vmem:[#allocation9 + $0x50] sm:$0xff]
    %v393 = vld [vmem:[#allocation9 + $0x58] sm:$0xff]
    %v394 = vld [vmem:[#allocation9 + $0x60] sm:$0xff]
    %v395 = vld [vmem:[#allocation9 + $0x68] sm:$0xff]
    %v396 = vld [vmem:[#allocation9 + $0x70] sm:$0xff]
    %v397 = vld [vmem:[#allocation9 + $0x78] sm:$0xff]
    %v398 = vld [vmem:[%s5] sm:$0x1]
    %v400 = vperm.slane %v398, 0
    %402 = vmatpush.msra.mxu0 %v397
    %403 = vmatpush.msra.mxu0 %v396
    %404 = vmatpush.msra.mxu0 %v395
    %405 = vmatpush.msra.mxu0 %v394
    %406 = vmatpush.msra.mxu0 %v393
    %407 = vmatpush.msra.mxu0 %v392
    %408 = vmatpush.msra.mxu0 %v391
    %409 = vmatpush.msra.mxu0 %v390
    %410 = vmatpush.msra.mxu0 %v389
    %411 = vmatpush.msra.mxu0 %v388
    %412 = vmatpush.msra.mxu0 %v387
    %413 = vmatpush.msra.mxu0 %v386
    %414 = vmatpush.msra.mxu0 %v385
    %415 = vmatpush.msra.mxu0 %v384
    %416 = vmatpush.msra.mxu0 %v383
    %417 = vmatpush.msra.mxu0 %v382
    %418 = vmatmul.f32.gmra.mxu0 %v381
    %v419 = vpop.f32.mrf.mxu0
    %v420 = vadd.f32 %v400, %v419
    %421 = vdwg.mxu0
    %422 = vst [vmem:[#allocation11] sm:$0xff] %v420
    // Predicated region
    $region42: #{tpu_custom_call.1} parent=1 // pred_check
      _
    $region43: #{tpu_custom_call.1} parent=1 // pred_check_branch
      %424 = sbr.rel (0) target = $region45
    $region44: #{tpu_custom_call.1} parent=1 // pred_region
      %426 = vsyncadd [#allocation5], 0
      %s428 = sshll.u32 [#allocation11], 4
      %s429 = int_to_ptr.vmem [resolvable:$true] %s428
      %s430 = sshll.u32 %s6, 4
      %s431 = int_to_ptr.hbm [resolvable:$true] %s430
      %433 = dma.vmem_to_hbm [thread:$0]  %s429, 128, %s431, [#allocation5]
    $region45: #{tpu_custom_call.1} parent=1 // pred_fallthru
      _
    // Predicated region
    $region46: #{tpu_custom_call.1} parent=1 // pred_check
      _
    $region47: #{tpu_custom_call.1} parent=1 // pred_check_branch
      %435 = sbr.rel (0) target = $region49
    $region48: #{tpu_custom_call.1} parent=1 // pred_region
      %437 = dma.done [#allocation5], 128
    $region49: #{tpu_custom_call.1} parent=1 // pred_fallthru
      _
    %438 = vsyncpa [#allocation4], 1
    %439 = vsyncpa [#allocation7], 1
    %440 = vsyncpa [#allocation10], 1
    %441 = vsyncpa [#allocation5], 1

</llo_original>
